<compile_context>
chip_gen: v5e
topology: v5e:2x2
jax: 0.10.0
libtpu: 0.0.40
codegen_flags: <defaults>
</compile_context>

<pallas_src>
import functools

import jax
import jax.numpy as jnp
from jax.experimental import pallas as pl
from jax.experimental.pallas import tpu as pltpu


LANE = 128          # lane width: pad feature dims to multiples of this
SUBLANE_BF16 = 16   # bf16 packs 16 sublanes per vreg: batch tile multiple of this
NEG_BIG = -1e9      # bias for padded action columns -> softmax prob exactly 0


def _round_up(x, m):
    return ((x + m - 1) // m) * m


def _pad2(a, rows, cols, fill=0.0):
    r, c = a.shape
    if r == rows and c == cols:
        return a
    return jnp.pad(a, ((0, rows - r), (0, cols - c)), constant_values=fill)


def actor_kernel(x_ref, w1_ref, b1_ref, w2_ref, b2_ref, w3_ref, b3_ref, out_ref):
    """One batch tile: fc1+ReLU -> fc2+ReLU -> pi head -> softmax(dim=1), all in VMEM."""
    x = x_ref[...]  # bf16 (TB, d_in_p)

    # fc1 + ReLU   (bf16 x bf16 -> f32 accumulate on the MXU, epilogue in f32)
    h1 = jnp.dot(x, w1_ref[...], preferred_element_type=jnp.float32) + b1_ref[...]
    h1 = jnp.maximum(h1, 0.0)

    # fc2 + ReLU
    h2 = jnp.dot(h1.astype(jnp.bfloat16), w2_ref[...],
                 preferred_element_type=jnp.float32) + b2_ref[...]
    h2 = jnp.maximum(h2, 0.0)

    # pi head + softmax over actions (padded action columns carry -1e9 bias -> exp == 0)
    logits = jnp.dot(h2.astype(jnp.bfloat16), w3_ref[...],
                     preferred_element_type=jnp.float32) + b3_ref[...]
    m = jnp.max(logits, axis=1, keepdims=True)
    e = jnp.exp(logits - m)
    denom = jnp.sum(e, axis=1, keepdims=True)
    out_ref[...] = (e * pl.reciprocal(denom, approx=False)).astype(out_ref.dtype)


def actor_forward(state, params, *, block_b=256):
    """state: (B, input_dims) float32. params: dict of w1,b1,w2,b2,w3,b3 (f32).

    Returns softmax policy of shape (B, n_actions), float32.
    """
    w1, b1 = params["w1"], params["b1"]
    w2, b2 = params["w2"], params["b2"]
    w3, b3 = params["w3"], params["b3"]

    B, d_in = state.shape
    fc1_dims = w1.shape[1]
    fc2_dims = w2.shape[1]
    n_actions = w3.shape[1]

    # --- pad feature dims to lane-dense multiples of 128, batch to the tile size ---
    d_in_p = _round_up(d_in, LANE)
    h1_p = _round_up(fc1_dims, LANE)
    h2_p = _round_up(fc2_dims, LANE)
    a_p = _round_up(n_actions, LANE)

    tb = min(block_b, _round_up(B, SUBLANE_BF16))
    tb = _round_up(tb, SUBLANE_BF16)
    B_p = _round_up(B, tb)
    n_tiles = B_p // tb

    x_p = _pad2(state, B_p, d_in_p).astype(jnp.bfloat16)
    w1_p = _pad2(w1, d_in_p, h1_p).astype(jnp.bfloat16)
    w2_p = _pad2(w2, h1_p, h2_p).astype(jnp.bfloat16)
    w3_p = _pad2(w3, h2_p, a_p).astype(jnp.bfloat16)
    b1_p = _pad2(b1, 1, h1_p).astype(jnp.float32)
    b2_p = _pad2(b2, 1, h2_p).astype(jnp.float32)
    # Padded action columns get a huge negative bias so softmax gives them 0 probability.
    b3_p = _pad2(b3, 1, a_p, fill=NEG_BIG).astype(jnp.float32)

    batch_spec = pl.BlockSpec((tb, d_in_p), lambda i: (i, 0))
    out_spec = pl.BlockSpec((tb, a_p), lambda i: (i, 0))
    # Weights/biases: grid-invariant blocks (index_map ignores the batch index),
    # so they are DMA'd once and stay resident in VMEM across batch tiles.
    resident = lambda shape: pl.BlockSpec(shape, lambda i: (0, 0))

    out_padded = pl.pallas_call(
        actor_kernel,
        out_shape=jax.ShapeDtypeStruct((B_p, a_p), jnp.float32),
        grid=(n_tiles,),
        in_specs=[
            batch_spec,
            resident(w1_p.shape), resident(b1_p.shape),
            resident(w2_p.shape), resident(b2_p.shape),
            resident(w3_p.shape), resident(b3_p.shape),
        ],
        out_specs=out_spec,
        compiler_params=pltpu.CompilerParams(
            dimension_semantics=("parallel",),  # shards batch tiles across v7x's 2 TCs
        ),
    )(x_p, w1_p, b1_p, w2_p, b2_p, w3_p, b3_p)

    return out_padded[:B, :n_actions]


def init_params(key, input_dims, fc1_dims, fc2_dims, n_actions):
    """Deterministic init mimicking PyTorch Linear default (uniform +-1/sqrt(fan_in))."""
    ks = jax.random.split(key, 6)

    def linear(kw, kb, fan_in, fan_out):
        bound = 1.0 / jnp.sqrt(jnp.float32(fan_in))
        w = jax.random.uniform(kw, (fan_in, fan_out), jnp.float32, -bound, bound)
        b = jax.random.uniform(kb, (1, fan_out), jnp.float32, -bound, bound)
        return w, b

    w1, b1 = linear(ks[0], ks[1], input_dims, fc1_dims)
    w2, b2 = linear(ks[2], ks[3], fc1_dims, fc2_dims)
    w3, b3 = linear(ks[4], ks[5], fc2_dims, n_actions)
    return {"w1": w1, "b1": b1, "w2": w2, "b2": b2, "w3": w3, "b3": b3}


if __name__ == "__main__":
    # Small shapes consistent with the module: ActorNetwork(alpha, input_dims=16,
    # fc1_dims=32, fc2_dims=32, n_actions=8, ...)
    batch, input_dims, fc1_dims, fc2_dims, n_actions = 8, 16, 32, 32, 8

    key = jax.random.PRNGKey(0)
    k_state, k_params = jax.random.split(key)
    state = jax.random.normal(k_state, (batch, input_dims), jnp.float32)
    params = init_params(k_params, input_dims, fc1_dims, fc2_dims, n_actions)

    fwd = jax.jit(functools.partial(actor_forward))
    pi = jax.block_until_ready(fwd(state, params))

    # Reference check in plain JAX f32 (same math as the PyTorch forward).
    # Kernel uses bf16 MXU inputs with f32 accumulation -> compare at a bf16 tolerance.
    h1 = jnp.maximum(state @ params["w1"] + params["b1"], 0.0)
    h2 = jnp.maximum(h1 @ params["w2"] + params["b2"], 0.0)
    ref = jax.nn.softmax(h2 @ params["w3"] + params["b3"], axis=1)

    assert pi.shape == (batch, n_actions)
    assert jnp.allclose(jnp.sum(pi, axis=1), 1.0, atol=1e-5)     # f32 softmax epilogue
    assert jnp.allclose(pi, ref, atol=2e-2)                      # bf16 matmul tolerance

    print("KERNEL_OK")
</pallas_src>

<mosaic_0001>
module attributes {stable_mosaic.version = 11 : i64} {
  func.func @actor_kernel(%arg0: i32, %arg1: memref<16x128xbf16, #tpu.memory_space<vmem>>, %arg2: memref<128x128xbf16, #tpu.memory_space<vmem>>, %arg3: memref<1x128xf32, #tpu.memory_space<vmem>>, %arg4: memref<128x128xbf16, #tpu.memory_space<vmem>>, %arg5: memref<1x128xf32, #tpu.memory_space<vmem>>, %arg6: memref<128x128xbf16, #tpu.memory_space<vmem>>, %arg7: memref<1x128xf32, #tpu.memory_space<vmem>>, %arg8: memref<16x128xf32, #tpu.memory_space<vmem>>) attributes {dimension_semantics = [#tpu.dimension_semantics<parallel>], iteration_bounds = array<i64: 1>, scalar_prefetch = 0 : i64, scratch_operands = 0 : i64, tpu.core_type = #tpu.core_type<tc>, window_params = [{transform_indices = @transform_0, window_bounds = array<i64: 16, 128>}, {pipeline_mode = #tpu.pipeline_mode<synchronous>, transform_indices = @transform_1, window_bounds = array<i64: 128, 128>}, {pipeline_mode = #tpu.pipeline_mode<synchronous>, transform_indices = @transform_2, window_bounds = array<i64: 1, 128>}, {pipeline_mode = #tpu.pipeline_mode<synchronous>, transform_indices = @transform_3, window_bounds = array<i64: 128, 128>}, {pipeline_mode = #tpu.pipeline_mode<synchronous>, transform_indices = @transform_4, window_bounds = array<i64: 1, 128>}, {pipeline_mode = #tpu.pipeline_mode<synchronous>, transform_indices = @transform_5, window_bounds = array<i64: 128, 128>}, {pipeline_mode = #tpu.pipeline_mode<synchronous>, transform_indices = @transform_6, window_bounds = array<i64: 1, 128>}, {transform_indices = @transform_7, window_bounds = array<i64: 16, 128>}]} {
    %c0 = arith.constant 0 : index
    %c0_0 = arith.constant 0 : index
    %0 = vector.load %arg1[%c0, %c0_0] : memref<16x128xbf16, #tpu.memory_space<vmem>>, vector<16x128xbf16>
    %c0_1 = arith.constant 0 : index
    %c0_2 = arith.constant 0 : index
    %1 = vector.load %arg2[%c0_1, %c0_2] : memref<128x128xbf16, #tpu.memory_space<vmem>>, vector<128x128xbf16>
    %cst = arith.constant dense<0.000000e+00> : vector<16x128xf32>
    %2 = tpu.matmul %0, %1, %cst {dimension_numbers = #tpu.dot_dimension_numbers<[1], [0], [0], [1], [0, 0, 1, 1], [], []>} : vector<16x128xbf16>, vector<128x128xbf16>, vector<16x128xf32> -> vector<16x128xf32>
    %c0_3 = arith.constant 0 : index
    %c0_4 = arith.constant 0 : index
    %3 = vector.load %arg3[%c0_3, %c0_4] : memref<1x128xf32, #tpu.memory_space<vmem>>, vector<1x128xf32>
    %4 = vector.broadcast %3 : vector<1x128xf32> to vector<16x128xf32>
    %5 = arith.addf %2, %4 : vector<16x128xf32>
    %cst_5 = arith.constant 0.000000e+00 : f32
    %6 = vector.broadcast %cst_5 : f32 to vector<16x128xf32>
    %7 = arith.maximumf %5, %6 : vector<16x128xf32>
    %8 = arith.truncf %7 : vector<16x128xf32> to vector<16x128xbf16>
    %c0_6 = arith.constant 0 : index
    %c0_7 = arith.constant 0 : index
    %9 = vector.load %arg4[%c0_6, %c0_7] : memref<128x128xbf16, #tpu.memory_space<vmem>>, vector<128x128xbf16>
    %cst_8 = arith.constant dense<0.000000e+00> : vector<16x128xf32>
    %10 = tpu.matmul %8, %9, %cst_8 {dimension_numbers = #tpu.dot_dimension_numbers<[1], [0], [0], [1], [0, 0, 1, 1], [], []>} : vector<16x128xbf16>, vector<128x128xbf16>, vector<16x128xf32> -> vector<16x128xf32>
    %c0_9 = arith.constant 0 : index
    %c0_10 = arith.constant 0 : index
    %11 = vector.load %arg5[%c0_9, %c0_10] : memref<1x128xf32, #tpu.memory_space<vmem>>, vector<1x128xf32>
    %12 = vector.broadcast %11 : vector<1x128xf32> to vector<16x128xf32>
    %13 = arith.addf %10, %12 : vector<16x128xf32>
    %cst_11 = arith.constant 0.000000e+00 : f32
    %14 = vector.broadcast %cst_11 : f32 to vector<16x128xf32>
    %15 = arith.maximumf %13, %14 : vector<16x128xf32>
    %16 = arith.truncf %15 : vector<16x128xf32> to vector<16x128xbf16>
    %c0_12 = arith.constant 0 : index
    %c0_13 = arith.constant 0 : index
    %17 = vector.load %arg6[%c0_12, %c0_13] : memref<128x128xbf16, #tpu.memory_space<vmem>>, vector<128x128xbf16>
    %cst_14 = arith.constant dense<0.000000e+00> : vector<16x128xf32>
    %18 = tpu.matmul %16, %17, %cst_14 {dimension_numbers = #tpu.dot_dimension_numbers<[1], [0], [0], [1], [0, 0, 1, 1], [], []>} : vector<16x128xbf16>, vector<128x128xbf16>, vector<16x128xf32> -> vector<16x128xf32>
    %c0_15 = arith.constant 0 : index
    %c0_16 = arith.constant 0 : index
    %19 = vector.load %arg7[%c0_15, %c0_16] : memref<1x128xf32, #tpu.memory_space<vmem>>, vector<1x128xf32>
    %20 = vector.broadcast %19 : vector<1x128xf32> to vector<16x128xf32>
    %21 = arith.addf %18, %20 : vector<16x128xf32>
    %cst_17 = arith.constant dense<0xFF800000> : vector<16xf32>
    %22 = vector.multi_reduction <maximumf>, %21, %cst_17 [1] : vector<16x128xf32> to vector<16xf32>
    %23 = vector.shape_cast %22 : vector<16xf32> to vector<16x1xf32>
    %24 = vector.broadcast %23 : vector<16x1xf32> to vector<16x128xf32>
    %25 = arith.subf %21, %24 : vector<16x128xf32>
    %26 = math.exp %25 : vector<16x128xf32>
    %cst_18 = arith.constant dense<0.000000e+00> : vector<16xf32>
    %27 = vector.multi_reduction <add>, %26, %cst_18 [1] : vector<16x128xf32> to vector<16xf32>
    %28 = vector.shape_cast %27 : vector<16xf32> to vector<16x1xf32>
    %29 = tpu.reciprocal %28 : vector<16x1xf32> -> vector<16x1xf32>
    %30 = vector.broadcast %29 : vector<16x1xf32> to vector<16x128xf32>
    %31 = arith.mulf %26, %30 : vector<16x128xf32>
    %c0_19 = arith.constant 0 : index
    %c0_20 = arith.constant 0 : index
    %32 = vector.load %arg8[%c0_19, %c0_20] : memref<16x128xf32, #tpu.memory_space<vmem>>, vector<16x128xf32>
    tpu.vector_store %arg8[%c0_19, %c0_20], %31 {strides = array<i32>} : memref<16x128xf32, #tpu.memory_space<vmem>>, vector<16x128xf32>,
    return
  }
  func.func @transform_0(%arg0: i32) -> (i32, i32) {
    %c0_i32 = arith.constant 0 : i32
    %c0_i32_0 = arith.constant 0 : i32
    return %arg0, %c0_i32 : i32, i32
  }
  func.func @transform_1(%arg0: i32) -> (i32, i32) {
    %c0_i32 = arith.constant 0 : i32
    %c0_i32_0 = arith.constant 0 : i32
    %c0_i32_1 = arith.constant 0 : i32
    return %c0_i32, %c0_i32_0 : i32, i32
  }
  func.func @transform_2(%arg0: i32) -> (i32, i32) {
    %c0_i32 = arith.constant 0 : i32
    %c0_i32_0 = arith.constant 0 : i32
    %c0_i32_1 = arith.constant 0 : i32
    return %c0_i32, %c0_i32_0 : i32, i32
  }
  func.func @transform_3(%arg0: i32) -> (i32, i32) {
    %c0_i32 = arith.constant 0 : i32
    %c0_i32_0 = arith.constant 0 : i32
    %c0_i32_1 = arith.constant 0 : i32
    return %c0_i32, %c0_i32_0 : i32, i32
  }
  func.func @transform_4(%arg0: i32) -> (i32, i32) {
    %c0_i32 = arith.constant 0 : i32
    %c0_i32_0 = arith.constant 0 : i32
    %c0_i32_1 = arith.constant 0 : i32
    return %c0_i32, %c0_i32_0 : i32, i32
  }
  func.func @transform_5(%arg0: i32) -> (i32, i32) {
    %c0_i32 = arith.constant 0 : i32
    %c0_i32_0 = arith.constant 0 : i32
    %c0_i32_1 = arith.constant 0 : i32
    return %c0_i32, %c0_i32_0 : i32, i32
  }
  func.func @transform_6(%arg0: i32) -> (i32, i32) {
    %c0_i32 = arith.constant 0 : i32
    %c0_i32_0 = arith.constant 0 : i32
    %c0_i32_1 = arith.constant 0 : i32
    return %c0_i32, %c0_i32_0 : i32, i32
  }
  func.func @transform_7(%arg0: i32) -> (i32, i32) {
    %c0_i32 = arith.constant 0 : i32
    %c0_i32_0 = arith.constant 0 : i32
    return %arg0, %c0_i32 : i32, i32
  }
}

</mosaic_0001>

<llo_original>
// kernel: actor_forward.1
$region0: #{actor_forward.1}
  #allocation0 [shape = 'u32[]', space=smem, size = 0x4, offset = 0x4, fixed_abs, tag = 'smem constant byte address 0x4 - core index']
  #allocation1 [shape = 'u32[72,128]{1,0:T(1,128)}', space=vmem, size = 0x9000, scoped, tag = 'internal scratch']
  %s0 = inlined_call_operand.vmem [shape: bf16[16,128], index: 0, kind: input, shape index: {}]
  %s1 = inlined_call_operand.vmem [shape: bf16[128,128], index: 1, kind: input, shape index: {}]
  %s2 = inlined_call_operand.vmem [shape: f32[1,128], index: 2, kind: input, shape index: {}]
  %s3 = inlined_call_operand.vmem [shape: bf16[128,128], index: 3, kind: input, shape index: {}]
  %s4 = inlined_call_operand.vmem [shape: f32[1,128], index: 4, kind: input, shape index: {}]
  %s5 = inlined_call_operand.vmem [shape: bf16[128,128], index: 5, kind: input, shape index: {}]
  %s6 = inlined_call_operand.vmem [shape: f32[1,128], index: 6, kind: input, shape index: {}]
  %s7 = inlined_call_operand.vmem [shape: f32[16,128], index: 7, kind: output, shape index: {}]
  %s8 = sld [smem:[#allocation0]]
  $region38: #{actor_forward.1} parent=0
    _
  %s10 = ssub.s32 1, %s8
  %s11 = scalar_select 0, %s10, %s8
  // Predicated region
  $region2: #{actor_forward.1} parent=0 // pred_check
    _
  $region3: #{actor_forward.1} parent=0 // pred_check_branch
    %13 = sbr.rel (0) target = $region5
  $region4: #{actor_forward.1} parent=0 // pred_region
    _
  $region5: #{actor_forward.1} parent=0 // pred_fallthru
    _
  // Predicated region
  $region6: #{actor_forward.1} parent=0 // pred_check
    _
  $region7: #{actor_forward.1} parent=0 // pred_check_branch
    %15 = sbr.rel (0) target = $region9
  $region8: #{actor_forward.1} parent=0 // pred_region
    _
  $region9: #{actor_forward.1} parent=0 // pred_fallthru
    _
  // Predicated region
  $region10: #{actor_forward.1} parent=0 // pred_check
    _
  $region11: #{actor_forward.1} parent=0 // pred_check_branch
    %17 = sbr.rel (0) target = $region13
  $region12: #{actor_forward.1} parent=0 // pred_region
    _
  $region13: #{actor_forward.1} parent=0 // pred_fallthru
    _
  // Predicated region
  $region14: #{actor_forward.1} parent=0 // pred_check
    _
  $region15: #{actor_forward.1} parent=0 // pred_check_branch
    %19 = sbr.rel (0) target = $region17
  $region16: #{actor_forward.1} parent=0 // pred_region
    _
  $region17: #{actor_forward.1} parent=0 // pred_fallthru
    _
  // Predicated region
  $region18: #{actor_forward.1} parent=0 // pred_check
    _
  $region19: #{actor_forward.1} parent=0 // pred_check_branch
    %21 = sbr.rel (0) target = $region21
  $region20: #{actor_forward.1} parent=0 // pred_region
    _
  $region21: #{actor_forward.1} parent=0 // pred_fallthru
    _
  // Predicated region
  $region22: #{actor_forward.1} parent=0 // pred_check
    _
  $region23: #{actor_forward.1} parent=0 // pred_check_branch
    %23 = sbr.rel (0) target = $region25
  $region24: #{actor_forward.1} parent=0 // pred_region
    _
  $region25: #{actor_forward.1} parent=0 // pred_fallthru
    _
  // Predicated region
  $region26: #{actor_forward.1} parent=0 // pred_check
    _
  $region27: #{actor_forward.1} parent=0 // pred_check_branch
    %25 = sbr.rel (0) target = $region29
  $region28: #{actor_forward.1} parent=0 // pred_region
    _
  $region29: #{actor_forward.1} parent=0 // pred_fallthru
    _
  %v26 = vld [vmem:[%s0] sm:$0xf]
  %v27 = vld [vmem:[%s0 + $0x4] sm:$0xf]
  %v28 = vld [vmem:[%s1] sm:$0xf]
  %v29 = vld [vmem:[%s1 + $0x4] sm:$0xf]
  %v30 = vld [vmem:[%s1 + $0x8] sm:$0xf]
  %v31 = vld [vmem:[%s1 + $0xc] sm:$0xf]
  %v32 = vld [vmem:[%s1 + $0x10] sm:$0xf]
  %v33 = vld [vmem:[%s1 + $0x14] sm:$0xf]
  %v34 = vld [vmem:[%s1 + $0x18] sm:$0xf]
  %v35 = vld [vmem:[%s1 + $0x1c] sm:$0xf]
  %v36 = vld [vmem:[%s1 + $0x20] sm:$0xf]
  %v37 = vld [vmem:[%s1 + $0x24] sm:$0xf]
  %v38 = vld [vmem:[%s1 + $0x28] sm:$0xf]
  %v39 = vld [vmem:[%s1 + $0x2c] sm:$0xf]
  %v40 = vld [vmem:[%s1 + $0x30] sm:$0xf]
  %v41 = vld [vmem:[%s1 + $0x34] sm:$0xf]
  %v42 = vld [vmem:[%s1 + $0x38] sm:$0xf]
  %v43 = vld [vmem:[%s1 + $0x3c] sm:$0xf]
  %v44 = vld [vmem:[%s2] sm:$0x1]
  %v46 = vperm.slane %v44, 0
  %v50 = vunpack.c.l.b16 %v26
  %v51 = vunpack.c.l.b16 %v27
  %v52 = vpack.c.b16 %v51, %v50
  %v70 = vunpack.c.l.b16 %v28
  %v71 = vunpack.c.l.b16 %v29
  %v72 = vunpack.c.l.b16 %v30
  %v73 = vunpack.c.l.b16 %v31
  %v74 = vunpack.c.l.b16 %v32
  %v75 = vunpack.c.l.b16 %v33
  %v76 = vunpack.c.l.b16 %v34
  %v77 = vunpack.c.l.b16 %v35
  %v78 = vunpack.c.l.b16 %v36
  %v79 = vunpack.c.l.b16 %v37
  %v80 = vunpack.c.l.b16 %v38
  %v81 = vunpack.c.l.b16 %v39
  %v82 = vunpack.c.l.b16 %v40
  %v83 = vunpack.c.l.b16 %v41
  %v84 = vunpack.c.l.b16 %v42
  %v85 = vunpack.c.l.b16 %v43
  %v86 = vpack.c.b16 %v71, %v70
  %v87 = vpack.c.b16 %v73, %v72
  %v88 = vpack.c.b16 %v75, %v74
  %v89 = vpack.c.b16 %v77, %v76
  %v90 = vpack.c.b16 %v79, %v78
  %v91 = vpack.c.b16 %v81, %v80
  %v92 = vpack.c.b16 %v83, %v82
  %v93 = vpack.c.b16 %v85, %v84
  %102 = vmatpush.bf16.msra.mxu0 %v93
  %103 = vmatpush.bf16.msra.mxu0 %v92
  %104 = vmatpush.bf16.msra.mxu0 %v91
  %105 = vmatpush.bf16.msra.mxu0 %v90
  %106 = vmatpush.bf16.msra.mxu0 %v89
  %107 = vmatpush.bf16.msra.mxu0 %v88
  %108 = vmatpush.bf16.msra.mxu0 %v87
  %109 = vmatpush.bf16.msra.mxu0 %v86
  %110 = vmatmul.bf16.gmra.mxu0 %v52
  %v111 = vpop.f32.mrf.mxu0
  %v112 = vadd.f32 %v46, %v111
  %v113 = vpop.f32.mrf.mxu0
  %v114 = vadd.f32 %v46, %v113
  %115 = vdwg.mxu0
  %v116 = vmax.f32 %v112, 0.0
  %v117 = vmax.f32 %v114, 0.0
  %v118 = vpack.c.bf16 %v117, %v116
  %v119 = vld [vmem:[%s3] sm:$0xf]
  %v120 = vld [vmem:[%s3 + $0x4] sm:$0xf]
  %v121 = vld [vmem:[%s3 + $0x8] sm:$0xf]
  %v122 = vld [vmem:[%s3 + $0xc] sm:$0xf]
  %v123 = vld [vmem:[%s3 + $0x10] sm:$0xf]
  %v124 = vld [vmem:[%s3 + $0x14] sm:$0xf]
  %v125 = vld [vmem:[%s3 + $0x18] sm:$0xf]
  %v126 = vld [vmem:[%s3 + $0x1c] sm:$0xf]
  %v127 = vld [vmem:[%s3 + $0x20] sm:$0xf]
  %v128 = vld [vmem:[%s3 + $0x24] sm:$0xf]
  %v129 = vld [vmem:[%s3 + $0x28] sm:$0xf]
  %v130 = vld [vmem:[%s3 + $0x2c] sm:$0xf]
  %v131 = vld [vmem:[%s3 + $0x30] sm:$0xf]
  %v132 = vld [vmem:[%s3 + $0x34] sm:$0xf]
  %v133 = vld [vmem:[%s3 + $0x38] sm:$0xf]
  %v134 = vld [vmem:[%s3 + $0x3c] sm:$0xf]
  %v135 = vld [vmem:[%s4] sm:$0x1]
  %v137 = vperm.slane %v135, 0
  %v155 = vunpack.c.l.b16 %v119
  %v156 = vunpack.c.l.b16 %v120
  %v157 = vunpack.c.l.b16 %v121
  %v158 = vunpack.c.l.b16 %v122
  %v159 = vunpack.c.l.b16 %v123
  %v160 = vunpack.c.l.b16 %v124
  %v161 = vunpack.c.l.b16 %v125
  %v162 = vunpack.c.l.b16 %v126
  %v163 = vunpack.c.l.b16 %v127
  %v164 = vunpack.c.l.b16 %v128
  %v165 = vunpack.c.l.b16 %v129
  %v166 = vunpack.c.l.b16 %v130
  %v167 = vunpack.c.l.b16 %v131
  %v168 = vunpack.c.l.b16 %v132
  %v169 = vunpack.c.l.b16 %v133
  %v170 = vunpack.c.l.b16 %v134
  %v171 = vpack.c.b16 %v156, %v155
  %v172 = vpack.c.b16 %v158, %v157
  %v173 = vpack.c.b16 %v160, %v159
  %v174 = vpack.c.b16 %v162, %v161
  %v175 = vpack.c.b16 %v164, %v163
  %v176 = vpack.c.b16 %v166, %v165
  %v177 = vpack.c.b16 %v168, %v167
  %v178 = vpack.c.b16 %v170, %v169
  %187 = vmatpush.bf16.msra.mxu0 %v178
  %188 = vmatpush.bf16.msra.mxu0 %v177
  %189 = vmatpush.bf16.msra.mxu0 %v176
  %190 = vmatpush.bf16.msra.mxu0 %v175
  %191 = vmatpush.bf16.msra.mxu0 %v174
  %192 = vmatpush.bf16.msra.mxu0 %v173
  %193 = vmatpush.bf16.msra.mxu0 %v172
  %194 = vmatpush.bf16.msra.mxu0 %v171
  %195 = vmatmul.bf16.gmra.mxu0 %v118
  %v196 = vpop.f32.mrf.mxu0
  %v197 = vadd.f32 %v137, %v196
  %v198 = vpop.f32.mrf.mxu0
  %v199 = vadd.f32 %v137, %v198
  %200 = vdwg.mxu0
  %v201 = vmax.f32 %v197, 0.0
  %v202 = vmax.f32 %v199, 0.0
  %v203 = vpack.c.bf16 %v202, %v201
  %v204 = vld [vmem:[%s5] sm:$0xf]
  %v205 = vld [vmem:[%s5 + $0x4] sm:$0xf]
  %v206 = vld [vmem:[%s5 + $0x8] sm:$0xf]
  %v207 = vld [vmem:[%s5 + $0xc] sm:$0xf]
  %v208 = vld [vmem:[%s5 + $0x10] sm:$0xf]
  %v209 = vld [vmem:[%s5 + $0x14] sm:$0xf]
  %v210 = vld [vmem:[%s5 + $0x18] sm:$0xf]
  %v211 = vld [vmem:[%s5 + $0x1c] sm:$0xf]
  %v212 = vld [vmem:[%s5 + $0x20] sm:$0xf]
  %v213 = vld [vmem:[%s5 + $0x24] sm:$0xf]
  %v214 = vld [vmem:[%s5 + $0x28] sm:$0xf]
  %v215 = vld [vmem:[%s5 + $0x2c] sm:$0xf]
  %v216 = vld [vmem:[%s5 + $0x30] sm:$0xf]
  %v217 = vld [vmem:[%s5 + $0x34] sm:$0xf]
  %v218 = vld [vmem:[%s5 + $0x38] sm:$0xf]
  %v219 = vld [vmem:[%s5 + $0x3c] sm:$0xf]
  %v220 = vld [vmem:[%s6] sm:$0x1]
  %v222 = vperm.slane %v220, 0
  %v240 = vunpack.c.l.b16 %v204
  %v241 = vunpack.c.l.b16 %v205
  %v242 = vunpack.c.l.b16 %v206
  %v243 = vunpack.c.l.b16 %v207
  %v244 = vunpack.c.l.b16 %v208
  %v245 = vunpack.c.l.b16 %v209
  %v246 = vunpack.c.l.b16 %v210
  %v247 = vunpack.c.l.b16 %v211
  %v248 = vunpack.c.l.b16 %v212
  %v249 = vunpack.c.l.b16 %v213
  %v250 = vunpack.c.l.b16 %v214
  %v251 = vunpack.c.l.b16 %v215
  %v252 = vunpack.c.l.b16 %v216
  %v253 = vunpack.c.l.b16 %v217
  %v254 = vunpack.c.l.b16 %v218
  %v255 = vunpack.c.l.b16 %v219
  %v256 = vpack.c.b16 %v241, %v240
  %v257 = vpack.c.b16 %v243, %v242
  %v258 = vpack.c.b16 %v245, %v244
  %v259 = vpack.c.b16 %v247, %v246
  %v260 = vpack.c.b16 %v249, %v248
  %v261 = vpack.c.b16 %v251, %v250
  %v262 = vpack.c.b16 %v253, %v252
  %v263 = vpack.c.b16 %v255, %v254
  %272 = vmatpush.bf16.msra.mxu0 %v263
  %273 = vmatpush.bf16.msra.mxu0 %v262
  %274 = vmatpush.bf16.msra.mxu0 %v261
  %275 = vmatpush.bf16.msra.mxu0 %v260
  %276 = vmatpush.bf16.msra.mxu0 %v259
  %277 = vmatpush.bf16.msra.mxu0 %v258
  %278 = vmatpush.bf16.msra.mxu0 %v257
  %279 = vmatpush.bf16.msra.mxu0 %v256
  %280 = vmatmul.bf16.gmra.mxu0 %v203
  %v281 = vpop.f32.mrf.mxu0
  %v282 = vadd.f32 %v222, %v281
  %v283 = vpop.f32.mrf.mxu0
  %v284 = vadd.f32 %v222, %v283
  %285 = vdwg.mxu0
  %286 = vmax.xlane.f32.xlu0 %v282
  %v287 = vpop.xlane.xlu0 %286
  %288 = vmax.xlane.f32.xlu0 %v284
  %v289 = vpop.xlane.xlu0 %288
  %v290 = vsub.f32 %v282, %v287
  %v291 = vsub.f32 %v284, %v289
  %v292 = vmul.f32 %v290, 1.442695
  %v293 = vpow.pop %v292
  %v294 = vmul.f32 %v291, 1.442695
  %v295 = vpow.pop %v294
  %296 = vadd.xlane.f32.xlu0 %v293
  %v297 = vpop.xlane.xlu0 %296
  %298 = vadd.xlane.f32.xlu0 %v295
  %v299 = vpop.xlane.xlu0 %298
  %v300 = vrcp.pop %v297
  %v301 = vmul.f32 %v297, %v300
  %v302 = vsub.f32 1.0, %v301
  %v303 = vmul.f32 %v300, %v302
  %v304 = vadd.f32 %v300, %v303
  %vm305 = vweird.f32 %v297
  %vm306 = vweird.f32 %v300
  %vm307 = vmor %vm305, %vm306
  %v308 = vsel %vm307, %v300, %v304
  %v309 = vand.u32 2147483647, %v297
  %vm310 = vcmp.eq.f32.partialorder %v309, 8.507059e+37
  %v311 = vand.u32 %v297, 2147483648
  %v312 = vor.u32 1.1754944e-38, %v311
  %v313 = vsel %vm310, %v312, %v308
  %v314 = vrcp.pop %v299
  %v315 = vmul.f32 %v299, %v314
  %v316 = vsub.f32 1.0, %v315
  %v317 = vmul.f32 %v314, %v316
  %v318 = vadd.f32 %v314, %v317
  %vm319 = vweird.f32 %v299
  %vm320 = vweird.f32 %v314
  %vm321 = vmor %vm319, %vm320
  %v322 = vsel %vm321, %v314, %v318
  %v323 = vand.u32 2147483647, %v299
  %vm324 = vcmp.eq.f32.partialorder %v323, 8.507059e+37
  %v325 = vand.u32 %v299, 2147483648
  %v326 = vor.u32 1.1754944e-38, %v325
  %v327 = vsel %vm324, %v326, %v322
  %v328 = vmul.f32 %v293, %v313
  %v329 = vmul.f32 %v295, %v327
  %330 = vst [vmem:[%s7] sm:$0xff] %v328
  %331 = vst [vmem:[%s7 + $0x8] sm:$0xff] %v329
  // Predicated region
  $region30: #{actor_forward.1} parent=0 // pred_check
    _
  $region31: #{actor_forward.1} parent=0 // pred_check_branch
    %333 = sbr.rel (0) target = $region33
  $region32: #{actor_forward.1} parent=0 // pred_region
    _
  $region33: #{actor_forward.1} parent=0 // pred_fallthru
    _
  // Predicated region
  $region34: #{actor_forward.1} parent=0 // pred_check
    _
  $region35: #{actor_forward.1} parent=0 // pred_check_branch
    %335 = sbr.rel (0) target = $region37
  $region36: #{actor_forward.1} parent=0 // pred_region
    _
  $region37: #{actor_forward.1} parent=0 // pred_fallthru
    _

</llo_original>
